<compile_context>
chip_gen: v6e
topology: v6e:2x2x1
jax: 0.10.0
libtpu: 0.0.40
codegen_flags: <defaults>
</compile_context>

<pallas_src>
import numpy as np
import jax
import jax.numpy as jnp
from jax.experimental import pallas as pl
from jax.experimental.pallas import tpu as pltpu


# ----------------------------------------------------------------------------
# Pallas kernel: fused  DMA-gather(pe, clamp(t)) -> Linear -> SiLU -> Linear
# ----------------------------------------------------------------------------
def _timestep_embedder_kernel(ts_ref, pe_hbm, w1_ref, b1_ref, w2_ref, b2_ref,
                              o_ref, x_ref, sem):
    # ts_ref : SMEM [B] int32          (raw timesteps, clamped here)
    # pe_hbm : HBM  [L, Dp] f32        (lane-padded sinusoidal table, NOT staged)
    # w*_ref : VMEM [Dp, Dp] bf16      (lane-padded weights, [in, out] layout)
    # b*_ref : VMEM [1, Dp] f32
    # o_ref  : VMEM [B, Dp] f32
    # x_ref  : VMEM [B, Dp] f32 scratch (DMA destination for gathered rows)
    # sem    : DMA semaphores, shape (B,)
    B = o_ref.shape[0]
    L = pe_hbm.shape[0]
    t_max = min(999, L - 1)          # static; guards OOB reads on small tables

    # 1) Gather: issue B independent 512 B row DMAs straight from HBM, then
    #    wait for all of them.  The copies overlap each other (and the weight
    #    prologue DMAs), so this is ~one DMA latency instead of a 512 KiB pull.
    copies = []
    for i in range(B):                                   # B is small & static
        t = jnp.clip(ts_ref[i], 0, t_max)                # torch clamp(0, 999)
        cp = pltpu.make_async_copy(pe_hbm.at[pl.ds(t, 1), :],
                                   x_ref.at[pl.ds(i, 1), :],
                                   sem.at[i])
        cp.start()
        copies.append(cp)
    for cp in copies:
        cp.wait()

    # 2) MLP: bf16 MXU operands, f32 accumulation; biases / SiLU stay in f32
    #    (v5e VPU/EUP have no bf16 path; at (8,128) this is a single vreg).
    x = x_ref[...].astype(jnp.bfloat16)                                  # [B, Dp]
    h = jnp.dot(x, w1_ref[...], preferred_element_type=jnp.float32)      # [B, Dp]
    h = h + b1_ref[...]                                                  # broadcast [1, Dp]
    # SiLU: h * sigmoid(h); the divide goes to the EUP via approx reciprocal.
    h = h * pl.reciprocal(1.0 + jnp.exp(-h), approx=True)
    y = jnp.dot(h.astype(jnp.bfloat16), w2_ref[...],
                preferred_element_type=jnp.float32)                      # [B, Dp]
    o_ref[...] = (y + b2_ref[...]).astype(o_ref.dtype)


def timestep_embed(timesteps, pe_pad, w1, b1, w2, b2):
    """timesteps: [B] int32; pe_pad: [L, Dp] f32; w*: [Dp, Dp] bf16; b*: [1, Dp] f32.

    Returns the lane-padded embedding [B, Dp] f32.
    """
    B = timesteps.shape[0]
    Dp = pe_pad.shape[-1]
    # Single no-grid invocation: VMEM footprint is < 100 KiB (two bf16 128x128
    # weights + a couple of (B,128) vregs); the PE table never enters VMEM.
    # TODO(synk): if this embedder sits on a latency-critical diffusion step,
    #   fuse it into the consumer kernel (or precompute SiLU(pe@W1+b1) for
    #   frozen inference) to amortize the per-pallas_call fixed overhead.
    return pl.pallas_call(
        _timestep_embedder_kernel,
        out_shape=jax.ShapeDtypeStruct((B, Dp), jnp.float32),
        in_specs=[
            pl.BlockSpec(memory_space=pltpu.MemorySpace.SMEM),   # timesteps
            pl.BlockSpec(memory_space=pl.ANY),                   # pe table (HBM)
            pl.BlockSpec(memory_space=pltpu.MemorySpace.VMEM),   # w1 (bf16)
            pl.BlockSpec(memory_space=pltpu.MemorySpace.VMEM),   # b1
            pl.BlockSpec(memory_space=pltpu.MemorySpace.VMEM),   # w2 (bf16)
            pl.BlockSpec(memory_space=pltpu.MemorySpace.VMEM),   # b2
        ],
        out_specs=pl.BlockSpec(memory_space=pltpu.MemorySpace.VMEM),
        scratch_shapes=[
            pltpu.VMEM((B, Dp), jnp.float32),      # gathered x (DMA dst)
            pltpu.SemaphoreType.DMA((B,)),         # one sem per row copy
        ],
    )(timesteps, pe_pad, w1, b1, w2, b2)


# ----------------------------------------------------------------------------
# Module: parameter construction + forward wrapper
# ----------------------------------------------------------------------------
def make_sinusoidal_pe(max_len, d_model):
    """Standard batch-first PositionalEncoding buffer: [1, max_len, d_model]."""
    position = np.arange(max_len, dtype=np.float32)[:, None]
    div_term = np.exp(np.arange(0, d_model, 2, dtype=np.float32)
                      * (-np.log(10000.0) / d_model))
    pe = np.zeros((max_len, d_model), dtype=np.float32)
    pe[:, 0::2] = np.sin(position * div_term)
    pe[:, 1::2] = np.cos(position * div_term)
    return jnp.asarray(pe[None, :, :])  # [1, max_len, d_model]


def init_timestep_embedder_params(key, latent_dim):
    """Deterministic init of the two Linear(D, D) layers (fan-in uniform, like torch)."""
    k1, k2, k3, k4 = jax.random.split(key, 4)
    bound = 1.0 / np.sqrt(latent_dim)
    # Stored as [in, out] so forward is x @ W + b (equivalent to torch's x @ W.T).
    w1 = jax.random.uniform(k1, (latent_dim, latent_dim), jnp.float32, -bound, bound)
    b1 = jax.random.uniform(k2, (latent_dim,), jnp.float32, -bound, bound)
    w2 = jax.random.uniform(k3, (latent_dim, latent_dim), jnp.float32, -bound, bound)
    b2 = jax.random.uniform(k4, (latent_dim,), jnp.float32, -bound, bound)
    return {"w1": w1, "b1": b1, "w2": w2, "b2": b2}


def _round_up(x, m):
    return (x + m - 1) // m * m


def prepare_kernel_params(params, pe, lane=128):
    """One-time layout prep: lane-pad D -> multiple of 128 and pre-cast weights to bf16.

    Zero padding keeps the padded lanes exactly zero through Linear->SiLU->Linear,
    so the first D output lanes equal the unpadded computation.  The PE table
    stays f32 (only B rows are ever DMA'd from HBM, so its size is irrelevant).
    """
    D = params["w1"].shape[0]
    Dp = _round_up(max(D, lane), lane)
    pe2 = pe[0]                                              # [max_len, D]
    L = pe2.shape[0]
    # Torch clamps timesteps to [0, 999]; make sure the table covers that range
    # (the kernel additionally clamps to L-1 so it can never read out of bounds).
    assert L >= 1000, f"pe table must have >= 1000 rows, got {L}"
    pe_pad = jnp.zeros((L, Dp), jnp.float32).at[:, :D].set(pe2)

    def pad_w(w):
        wp = jnp.zeros((Dp, Dp), jnp.float32).at[:D, :D].set(w)
        return wp.astype(jnp.bfloat16)                       # bf16 MXU operands

    def pad_b(b):
        return jnp.zeros((1, Dp), jnp.float32).at[0, :D].set(b)

    return {
        "pe": pe_pad,
        "w1": pad_w(params["w1"]), "b1": pad_b(params["b1"]),
        "w2": pad_w(params["w2"]), "b2": pad_b(params["b2"]),
    }, D


def timestep_embedder_forward(kparams, latent_dim, timesteps):
    """timesteps: [B] int. Returns [B, 1, latent_dim] f32 (matches torch permute(1,0,2))."""
    y = timestep_embed(timesteps.astype(jnp.int32), kparams["pe"],
                       kparams["w1"], kparams["b1"],
                       kparams["w2"], kparams["b2"])         # [B, Dp]
    # torch: [1, B, D].permute(1, 0, 2) -> [B, 1, D]; drop the zero padding lanes.
    return y[:, None, :latent_dim]


# Pure-JAX f32 reference for correctness checking.
def timestep_embedder_ref(params, pe, timesteps):
    t = jnp.clip(timesteps, 0, 999)
    x = jnp.take(pe[0], t, axis=0)
    h = x @ params["w1"] + params["b1"]
    h = h * jax.nn.sigmoid(h)
    y = h @ params["w2"] + params["b2"]
    return y[:, None, :]


if __name__ == "__main__":
    latent_dim = 32
    max_len = 1024           # must cover clamp range [0, 999]
    batch = 8

    key = jax.random.PRNGKey(0)
    k_param, k_t = jax.random.split(key)

    params = init_timestep_embedder_params(k_param, latent_dim)
    pe = make_sinusoidal_pe(max_len, latent_dim)
    kparams, D = prepare_kernel_params(params, pe)

    # Deterministic example timesteps (include out-of-range values to exercise clamp).
    timesteps = jax.random.randint(k_t, (batch,), 0, 1500, dtype=jnp.int32)

    out = timestep_embedder_forward(kparams, D, timesteps)
    out = jax.block_until_ready(out)

    ref = timestep_embedder_ref(params, pe, timesteps)
    assert out.shape == (batch, 1, latent_dim), out.shape
    # bf16 matmul operands (f32 accumulation) + approx-EUP sigmoid divide:
    # compare against the f32 reference with a correspondingly loosened tolerance.
    np.testing.assert_allclose(np.asarray(out), np.asarray(ref), rtol=2e-2, atol=2e-2)

    print("KERNEL_OK")
</pallas_src>

<mosaic_0001>
module attributes {stable_mosaic.version = 11 : i64} {
  func.func @_timestep_embedder_kernel(%arg0: memref<8xi32, #tpu.memory_space<smem>>, %arg1: memref<1024x128xf32, #tpu.memory_space<any>>, %arg2: memref<128x128xbf16, #tpu.memory_space<vmem>>, %arg3: memref<1x128xf32, #tpu.memory_space<vmem>>, %arg4: memref<128x128xbf16, #tpu.memory_space<vmem>>, %arg5: memref<1x128xf32, #tpu.memory_space<vmem>>, %arg6: memref<8x128xf32, #tpu.memory_space<vmem>>, %arg7: memref<8x128xf32, #tpu.memory_space<vmem>>, %arg8: memref<8x!tpu.dma_semaphore, #tpu.memory_space<semaphore_mem>>) attributes {dimension_semantics = [], scalar_prefetch = 0 : i64, scratch_operands = 2 : i64, tpu.core_type = #tpu.core_type<tc>} {
    %c0 = arith.constant 0 : index
    %0 = memref.load %arg0[%c0] : memref<8xi32, #tpu.memory_space<smem>>
    %c0_i32 = arith.constant 0 : i32
    %c999_i32 = arith.constant 999 : i32
    %1 = arith.maxsi %c0_i32, %0 : i32
    %2 = arith.minsi %c999_i32, %1 : i32
    %c0_i32_0 = arith.constant 0 : i32
    %c0_i32_1 = arith.constant 0 : i32
    %3 = tpu.memref_slice %arg1[%2, %c0_i32_1] : memref<1024x128xf32, #tpu.memory_space<any>> -> memref<1x128xf32, #tpu.memory_space<any>>
    %c0_i32_2 = arith.constant 0 : i32
    %c0_i32_3 = arith.constant 0 : i32
    %4 = tpu.memref_slice %arg7[%c0_i32_2, %c0_i32_3] : memref<8x128xf32, #tpu.memory_space<vmem>> -> memref<1x128xf32, #tpu.memory_space<vmem>>
    %5 = tpu.memref_slice %arg8[%c0_i32_0] : memref<8x!tpu.dma_semaphore, #tpu.memory_space<semaphore_mem>> -> memref<1x!tpu.dma_semaphore, #tpu.memory_space<semaphore_mem>>
    %6 = tpu.memref_squeeze %5 : memref<1x!tpu.dma_semaphore, #tpu.memory_space<semaphore_mem>> -> memref<!tpu.dma_semaphore, #tpu.memory_space<semaphore_mem>>
    tpu.enqueue_dma source(%3 : memref<1x128xf32, #tpu.memory_space<any>>) target(%4 : memref<1x128xf32, #tpu.memory_space<vmem>>) target_semaphore(%6 : memref<!tpu.dma_semaphore, #tpu.memory_space<semaphore_mem>>)
    %c1 = arith.constant 1 : index
    %7 = memref.load %arg0[%c1] : memref<8xi32, #tpu.memory_space<smem>>
    %c0_i32_4 = arith.constant 0 : i32
    %c999_i32_5 = arith.constant 999 : i32
    %8 = arith.maxsi %c0_i32_4, %7 : i32
    %9 = arith.minsi %c999_i32_5, %8 : i32
    %c1_i32 = arith.constant 1 : i32
    %c0_i32_6 = arith.constant 0 : i32
    %10 = tpu.memref_slice %arg1[%9, %c0_i32_6] : memref<1024x128xf32, #tpu.memory_space<any>> -> memref<1x128xf32, #tpu.memory_space<any>>
    %c1_i32_7 = arith.constant 1 : i32
    %c0_i32_8 = arith.constant 0 : i32
    %11 = tpu.memref_slice %arg7[%c1_i32_7, %c0_i32_8] : memref<8x128xf32, #tpu.memory_space<vmem>> -> memref<1x128xf32, #tpu.memory_space<vmem>>
    %12 = tpu.memref_slice %arg8[%c1_i32] : memref<8x!tpu.dma_semaphore, #tpu.memory_space<semaphore_mem>> -> memref<1x!tpu.dma_semaphore, #tpu.memory_space<semaphore_mem>>
    %13 = tpu.memref_squeeze %12 : memref<1x!tpu.dma_semaphore, #tpu.memory_space<semaphore_mem>> -> memref<!tpu.dma_semaphore, #tpu.memory_space<semaphore_mem>>
    tpu.enqueue_dma source(%10 : memref<1x128xf32, #tpu.memory_space<any>>) target(%11 : memref<1x128xf32, #tpu.memory_space<vmem>>) target_semaphore(%13 : memref<!tpu.dma_semaphore, #tpu.memory_space<semaphore_mem>>)
    %c2 = arith.constant 2 : index
    %14 = memref.load %arg0[%c2] : memref<8xi32, #tpu.memory_space<smem>>
    %c0_i32_9 = arith.constant 0 : i32
    %c999_i32_10 = arith.constant 999 : i32
    %15 = arith.maxsi %c0_i32_9, %14 : i32
    %16 = arith.minsi %c999_i32_10, %15 : i32
    %c2_i32 = arith.constant 2 : i32
    %c0_i32_11 = arith.constant 0 : i32
    %17 = tpu.memref_slice %arg1[%16, %c0_i32_11] : memref<1024x128xf32, #tpu.memory_space<any>> -> memref<1x128xf32, #tpu.memory_space<any>>
    %c2_i32_12 = arith.constant 2 : i32
    %c0_i32_13 = arith.constant 0 : i32
    %18 = tpu.memref_slice %arg7[%c2_i32_12, %c0_i32_13] : memref<8x128xf32, #tpu.memory_space<vmem>> -> memref<1x128xf32, #tpu.memory_space<vmem>>
    %19 = tpu.memref_slice %arg8[%c2_i32] : memref<8x!tpu.dma_semaphore, #tpu.memory_space<semaphore_mem>> -> memref<1x!tpu.dma_semaphore, #tpu.memory_space<semaphore_mem>>
    %20 = tpu.memref_squeeze %19 : memref<1x!tpu.dma_semaphore, #tpu.memory_space<semaphore_mem>> -> memref<!tpu.dma_semaphore, #tpu.memory_space<semaphore_mem>>
    tpu.enqueue_dma source(%17 : memref<1x128xf32, #tpu.memory_space<any>>) target(%18 : memref<1x128xf32, #tpu.memory_space<vmem>>) target_semaphore(%20 : memref<!tpu.dma_semaphore, #tpu.memory_space<semaphore_mem>>)
    %c3 = arith.constant 3 : index
    %21 = memref.load %arg0[%c3] : memref<8xi32, #tpu.memory_space<smem>>
    %c0_i32_14 = arith.constant 0 : i32
    %c999_i32_15 = arith.constant 999 : i32
    %22 = arith.maxsi %c0_i32_14, %21 : i32
    %23 = arith.minsi %c999_i32_15, %22 : i32
    %c3_i32 = arith.constant 3 : i32
    %c0_i32_16 = arith.constant 0 : i32
    %24 = tpu.memref_slice %arg1[%23, %c0_i32_16] : memref<1024x128xf32, #tpu.memory_space<any>> -> memref<1x128xf32, #tpu.memory_space<any>>
    %c3_i32_17 = arith.constant 3 : i32
    %c0_i32_18 = arith.constant 0 : i32
    %25 = tpu.memref_slice %arg7[%c3_i32_17, %c0_i32_18] : memref<8x128xf32, #tpu.memory_space<vmem>> -> memref<1x128xf32, #tpu.memory_space<vmem>>
    %26 = tpu.memref_slice %arg8[%c3_i32] : memref<8x!tpu.dma_semaphore, #tpu.memory_space<semaphore_mem>> -> memref<1x!tpu.dma_semaphore, #tpu.memory_space<semaphore_mem>>
    %27 = tpu.memref_squeeze %26 : memref<1x!tpu.dma_semaphore, #tpu.memory_space<semaphore_mem>> -> memref<!tpu.dma_semaphore, #tpu.memory_space<semaphore_mem>>
    tpu.enqueue_dma source(%24 : memref<1x128xf32, #tpu.memory_space<any>>) target(%25 : memref<1x128xf32, #tpu.memory_space<vmem>>) target_semaphore(%27 : memref<!tpu.dma_semaphore, #tpu.memory_space<semaphore_mem>>)
    %c4 = arith.constant 4 : index
    %28 = memref.load %arg0[%c4] : memref<8xi32, #tpu.memory_space<smem>>
    %c0_i32_19 = arith.constant 0 : i32
    %c999_i32_20 = arith.constant 999 : i32
    %29 = arith.maxsi %c0_i32_19, %28 : i32
    %30 = arith.minsi %c999_i32_20, %29 : i32
    %c4_i32 = arith.constant 4 : i32
    %c0_i32_21 = arith.constant 0 : i32
    %31 = tpu.memref_slice %arg1[%30, %c0_i32_21] : memref<1024x128xf32, #tpu.memory_space<any>> -> memref<1x128xf32, #tpu.memory_space<any>>
    %c4_i32_22 = arith.constant 4 : i32
    %c0_i32_23 = arith.constant 0 : i32
    %32 = tpu.memref_slice %arg7[%c4_i32_22, %c0_i32_23] : memref<8x128xf32, #tpu.memory_space<vmem>> -> memref<1x128xf32, #tpu.memory_space<vmem>>
    %33 = tpu.memref_slice %arg8[%c4_i32] : memref<8x!tpu.dma_semaphore, #tpu.memory_space<semaphore_mem>> -> memref<1x!tpu.dma_semaphore, #tpu.memory_space<semaphore_mem>>
    %34 = tpu.memref_squeeze %33 : memref<1x!tpu.dma_semaphore, #tpu.memory_space<semaphore_mem>> -> memref<!tpu.dma_semaphore, #tpu.memory_space<semaphore_mem>>
    tpu.enqueue_dma source(%31 : memref<1x128xf32, #tpu.memory_space<any>>) target(%32 : memref<1x128xf32, #tpu.memory_space<vmem>>) target_semaphore(%34 : memref<!tpu.dma_semaphore, #tpu.memory_space<semaphore_mem>>)
    %c5 = arith.constant 5 : index
    %35 = memref.load %arg0[%c5] : memref<8xi32, #tpu.memory_space<smem>>
    %c0_i32_24 = arith.constant 0 : i32
    %c999_i32_25 = arith.constant 999 : i32
    %36 = arith.maxsi %c0_i32_24, %35 : i32
    %37 = arith.minsi %c999_i32_25, %36 : i32
    %c5_i32 = arith.constant 5 : i32
    %c0_i32_26 = arith.constant 0 : i32
    %38 = tpu.memref_slice %arg1[%37, %c0_i32_26] : memref<1024x128xf32, #tpu.memory_space<any>> -> memref<1x128xf32, #tpu.memory_space<any>>
    %c5_i32_27 = arith.constant 5 : i32
    %c0_i32_28 = arith.constant 0 : i32
    %39 = tpu.memref_slice %arg7[%c5_i32_27, %c0_i32_28] : memref<8x128xf32, #tpu.memory_space<vmem>> -> memref<1x128xf32, #tpu.memory_space<vmem>>
    %40 = tpu.memref_slice %arg8[%c5_i32] : memref<8x!tpu.dma_semaphore, #tpu.memory_space<semaphore_mem>> -> memref<1x!tpu.dma_semaphore, #tpu.memory_space<semaphore_mem>>
    %41 = tpu.memref_squeeze %40 : memref<1x!tpu.dma_semaphore, #tpu.memory_space<semaphore_mem>> -> memref<!tpu.dma_semaphore, #tpu.memory_space<semaphore_mem>>
    tpu.enqueue_dma source(%38 : memref<1x128xf32, #tpu.memory_space<any>>) target(%39 : memref<1x128xf32, #tpu.memory_space<vmem>>) target_semaphore(%41 : memref<!tpu.dma_semaphore, #tpu.memory_space<semaphore_mem>>)
    %c6 = arith.constant 6 : index
    %42 = memref.load %arg0[%c6] : memref<8xi32, #tpu.memory_space<smem>>
    %c0_i32_29 = arith.constant 0 : i32
    %c999_i32_30 = arith.constant 999 : i32
    %43 = arith.maxsi %c0_i32_29, %42 : i32
    %44 = arith.minsi %c999_i32_30, %43 : i32
    %c6_i32 = arith.constant 6 : i32
    %c0_i32_31 = arith.constant 0 : i32
    %45 = tpu.memref_slice %arg1[%44, %c0_i32_31] : memref<1024x128xf32, #tpu.memory_space<any>> -> memref<1x128xf32, #tpu.memory_space<any>>
    %c6_i32_32 = arith.constant 6 : i32
    %c0_i32_33 = arith.constant 0 : i32
    %46 = tpu.memref_slice %arg7[%c6_i32_32, %c0_i32_33] : memref<8x128xf32, #tpu.memory_space<vmem>> -> memref<1x128xf32, #tpu.memory_space<vmem>>
    %47 = tpu.memref_slice %arg8[%c6_i32] : memref<8x!tpu.dma_semaphore, #tpu.memory_space<semaphore_mem>> -> memref<1x!tpu.dma_semaphore, #tpu.memory_space<semaphore_mem>>
    %48 = tpu.memref_squeeze %47 : memref<1x!tpu.dma_semaphore, #tpu.memory_space<semaphore_mem>> -> memref<!tpu.dma_semaphore, #tpu.memory_space<semaphore_mem>>
    tpu.enqueue_dma source(%45 : memref<1x128xf32, #tpu.memory_space<any>>) target(%46 : memref<1x128xf32, #tpu.memory_space<vmem>>) target_semaphore(%48 : memref<!tpu.dma_semaphore, #tpu.memory_space<semaphore_mem>>)
    %c7 = arith.constant 7 : index
    %49 = memref.load %arg0[%c7] : memref<8xi32, #tpu.memory_space<smem>>
    %c0_i32_34 = arith.constant 0 : i32
    %c999_i32_35 = arith.constant 999 : i32
    %50 = arith.maxsi %c0_i32_34, %49 : i32
    %51 = arith.minsi %c999_i32_35, %50 : i32
    %c7_i32 = arith.constant 7 : i32
    %c0_i32_36 = arith.constant 0 : i32
    %52 = tpu.memref_slice %arg1[%51, %c0_i32_36] : memref<1024x128xf32, #tpu.memory_space<any>> -> memref<1x128xf32, #tpu.memory_space<any>>
    %c7_i32_37 = arith.constant 7 : i32
    %c0_i32_38 = arith.constant 0 : i32
    %53 = tpu.memref_slice %arg7[%c7_i32_37, %c0_i32_38] : memref<8x128xf32, #tpu.memory_space<vmem>> -> memref<1x128xf32, #tpu.memory_space<vmem>>
    %54 = tpu.memref_slice %arg8[%c7_i32] : memref<8x!tpu.dma_semaphore, #tpu.memory_space<semaphore_mem>> -> memref<1x!tpu.dma_semaphore, #tpu.memory_space<semaphore_mem>>
    %55 = tpu.memref_squeeze %54 : memref<1x!tpu.dma_semaphore, #tpu.memory_space<semaphore_mem>> -> memref<!tpu.dma_semaphore, #tpu.memory_space<semaphore_mem>>
    tpu.enqueue_dma source(%52 : memref<1x128xf32, #tpu.memory_space<any>>) target(%53 : memref<1x128xf32, #tpu.memory_space<vmem>>) target_semaphore(%55 : memref<!tpu.dma_semaphore, #tpu.memory_space<semaphore_mem>>)
    %c0_i32_39 = arith.constant 0 : i32
    %c0_i32_40 = arith.constant 0 : i32
    %56 = tpu.memref_slice %arg1[%2, %c0_i32_40] : memref<1024x128xf32, #tpu.memory_space<any>> -> memref<1x128xf32, #tpu.memory_space<any>>
    %c0_i32_41 = arith.constant 0 : i32
    %c0_i32_42 = arith.constant 0 : i32
    %57 = tpu.memref_slice %arg7[%c0_i32_41, %c0_i32_42] : memref<8x128xf32, #tpu.memory_space<vmem>> -> memref<1x128xf32, #tpu.memory_space<vmem>>
    %58 = tpu.memref_slice %arg8[%c0_i32_39] : memref<8x!tpu.dma_semaphore, #tpu.memory_space<semaphore_mem>> -> memref<1x!tpu.dma_semaphore, #tpu.memory_space<semaphore_mem>>
    %59 = tpu.memref_squeeze %58 : memref<1x!tpu.dma_semaphore, #tpu.memory_space<semaphore_mem>> -> memref<!tpu.dma_semaphore, #tpu.memory_space<semaphore_mem>>
    tpu.wait_dma2 semaphore(%59 : memref<!tpu.dma_semaphore, #tpu.memory_space<semaphore_mem>>) src(%56 : memref<1x128xf32, #tpu.memory_space<any>>) dst(%57 : memref<1x128xf32, #tpu.memory_space<vmem>>)
    %c1_i32_43 = arith.constant 1 : i32
    %c0_i32_44 = arith.constant 0 : i32
    %60 = tpu.memref_slice %arg1[%9, %c0_i32_44] : memref<1024x128xf32, #tpu.memory_space<any>> -> memref<1x128xf32, #tpu.memory_space<any>>
    %c1_i32_45 = arith.constant 1 : i32
    %c0_i32_46 = arith.constant 0 : i32
    %61 = tpu.memref_slice %arg7[%c1_i32_45, %c0_i32_46] : memref<8x128xf32, #tpu.memory_space<vmem>> -> memref<1x128xf32, #tpu.memory_space<vmem>>
    %62 = tpu.memref_slice %arg8[%c1_i32_43] : memref<8x!tpu.dma_semaphore, #tpu.memory_space<semaphore_mem>> -> memref<1x!tpu.dma_semaphore, #tpu.memory_space<semaphore_mem>>
    %63 = tpu.memref_squeeze %62 : memref<1x!tpu.dma_semaphore, #tpu.memory_space<semaphore_mem>> -> memref<!tpu.dma_semaphore, #tpu.memory_space<semaphore_mem>>
    tpu.wait_dma2 semaphore(%63 : memref<!tpu.dma_semaphore, #tpu.memory_space<semaphore_mem>>) src(%60 : memref<1x128xf32, #tpu.memory_space<any>>) dst(%61 : memref<1x128xf32, #tpu.memory_space<vmem>>)
    %c2_i32_47 = arith.constant 2 : i32
    %c0_i32_48 = arith.constant 0 : i32
    %64 = tpu.memref_slice %arg1[%16, %c0_i32_48] : memref<1024x128xf32, #tpu.memory_space<any>> -> memref<1x128xf32, #tpu.memory_space<any>>
    %c2_i32_49 = arith.constant 2 : i32
    %c0_i32_50 = arith.constant 0 : i32
    %65 = tpu.memref_slice %arg7[%c2_i32_49, %c0_i32_50] : memref<8x128xf32, #tpu.memory_space<vmem>> -> memref<1x128xf32, #tpu.memory_space<vmem>>
    %66 = tpu.memref_slice %arg8[%c2_i32_47] : memref<8x!tpu.dma_semaphore, #tpu.memory_space<semaphore_mem>> -> memref<1x!tpu.dma_semaphore, #tpu.memory_space<semaphore_mem>>
    %67 = tpu.memref_squeeze %66 : memref<1x!tpu.dma_semaphore, #tpu.memory_space<semaphore_mem>> -> memref<!tpu.dma_semaphore, #tpu.memory_space<semaphore_mem>>
    tpu.wait_dma2 semaphore(%67 : memref<!tpu.dma_semaphore, #tpu.memory_space<semaphore_mem>>) src(%64 : memref<1x128xf32, #tpu.memory_space<any>>) dst(%65 : memref<1x128xf32, #tpu.memory_space<vmem>>)
    %c3_i32_51 = arith.constant 3 : i32
    %c0_i32_52 = arith.constant 0 : i32
    %68 = tpu.memref_slice %arg1[%23, %c0_i32_52] : memref<1024x128xf32, #tpu.memory_space<any>> -> memref<1x128xf32, #tpu.memory_space<any>>
    %c3_i32_53 = arith.constant 3 : i32
    %c0_i32_54 = arith.constant 0 : i32
    %69 = tpu.memref_slice %arg7[%c3_i32_53, %c0_i32_54] : memref<8x128xf32, #tpu.memory_space<vmem>> -> memref<1x128xf32, #tpu.memory_space<vmem>>
    %70 = tpu.memref_slice %arg8[%c3_i32_51] : memref<8x!tpu.dma_semaphore, #tpu.memory_space<semaphore_mem>> -> memref<1x!tpu.dma_semaphore, #tpu.memory_space<semaphore_mem>>
    %71 = tpu.memref_squeeze %70 : memref<1x!tpu.dma_semaphore, #tpu.memory_space<semaphore_mem>> -> memref<!tpu.dma_semaphore, #tpu.memory_space<semaphore_mem>>
    tpu.wait_dma2 semaphore(%71 : memref<!tpu.dma_semaphore, #tpu.memory_space<semaphore_mem>>) src(%68 : memref<1x128xf32, #tpu.memory_space<any>>) dst(%69 : memref<1x128xf32, #tpu.memory_space<vmem>>)
    %c4_i32_55 = arith.constant 4 : i32
    %c0_i32_56 = arith.constant 0 : i32
    %72 = tpu.memref_slice %arg1[%30, %c0_i32_56] : memref<1024x128xf32, #tpu.memory_space<any>> -> memref<1x128xf32, #tpu.memory_space<any>>
    %c4_i32_57 = arith.constant 4 : i32
    %c0_i32_58 = arith.constant 0 : i32
    %73 = tpu.memref_slice %arg7[%c4_i32_57, %c0_i32_58] : memref<8x128xf32, #tpu.memory_space<vmem>> -> memref<1x128xf32, #tpu.memory_space<vmem>>
    %74 = tpu.memref_slice %arg8[%c4_i32_55] : memref<8x!tpu.dma_semaphore, #tpu.memory_space<semaphore_mem>> -> memref<1x!tpu.dma_semaphore, #tpu.memory_space<semaphore_mem>>
    %75 = tpu.memref_squeeze %74 : memref<1x!tpu.dma_semaphore, #tpu.memory_space<semaphore_mem>> -> memref<!tpu.dma_semaphore, #tpu.memory_space<semaphore_mem>>
    tpu.wait_dma2 semaphore(%75 : memref<!tpu.dma_semaphore, #tpu.memory_space<semaphore_mem>>) src(%72 : memref<1x128xf32, #tpu.memory_space<any>>) dst(%73 : memref<1x128xf32, #tpu.memory_space<vmem>>)
    %c5_i32_59 = arith.constant 5 : i32
    %c0_i32_60 = arith.constant 0 : i32
    %76 = tpu.memref_slice %arg1[%37, %c0_i32_60] : memref<1024x128xf32, #tpu.memory_space<any>> -> memref<1x128xf32, #tpu.memory_space<any>>
    %c5_i32_61 = arith.constant 5 : i32
    %c0_i32_62 = arith.constant 0 : i32
    %77 = tpu.memref_slice %arg7[%c5_i32_61, %c0_i32_62] : memref<8x128xf32, #tpu.memory_space<vmem>> -> memref<1x128xf32, #tpu.memory_space<vmem>>
    %78 = tpu.memref_slice %arg8[%c5_i32_59] : memref<8x!tpu.dma_semaphore, #tpu.memory_space<semaphore_mem>> -> memref<1x!tpu.dma_semaphore, #tpu.memory_space<semaphore_mem>>
    %79 = tpu.memref_squeeze %78 : memref<1x!tpu.dma_semaphore, #tpu.memory_space<semaphore_mem>> -> memref<!tpu.dma_semaphore, #tpu.memory_space<semaphore_mem>>
    tpu.wait_dma2 semaphore(%79 : memref<!tpu.dma_semaphore, #tpu.memory_space<semaphore_mem>>) src(%76 : memref<1x128xf32, #tpu.memory_space<any>>) dst(%77 : memref<1x128xf32, #tpu.memory_space<vmem>>)
    %c6_i32_63 = arith.constant 6 : i32
    %c0_i32_64 = arith.constant 0 : i32
    %80 = tpu.memref_slice %arg1[%44, %c0_i32_64] : memref<1024x128xf32, #tpu.memory_space<any>> -> memref<1x128xf32, #tpu.memory_space<any>>
    %c6_i32_65 = arith.constant 6 : i32
    %c0_i32_66 = arith.constant 0 : i32
    %81 = tpu.memref_slice %arg7[%c6_i32_65, %c0_i32_66] : memref<8x128xf32, #tpu.memory_space<vmem>> -> memref<1x128xf32, #tpu.memory_space<vmem>>
    %82 = tpu.memref_slice %arg8[%c6_i32_63] : memref<8x!tpu.dma_semaphore, #tpu.memory_space<semaphore_mem>> -> memref<1x!tpu.dma_semaphore, #tpu.memory_space<semaphore_mem>>
    %83 = tpu.memref_squeeze %82 : memref<1x!tpu.dma_semaphore, #tpu.memory_space<semaphore_mem>> -> memref<!tpu.dma_semaphore, #tpu.memory_space<semaphore_mem>>
    tpu.wait_dma2 semaphore(%83 : memref<!tpu.dma_semaphore, #tpu.memory_space<semaphore_mem>>) src(%80 : memref<1x128xf32, #tpu.memory_space<any>>) dst(%81 : memref<1x128xf32, #tpu.memory_space<vmem>>)
    %c7_i32_67 = arith.constant 7 : i32
    %c0_i32_68 = arith.constant 0 : i32
    %84 = tpu.memref_slice %arg1[%51, %c0_i32_68] : memref<1024x128xf32, #tpu.memory_space<any>> -> memref<1x128xf32, #tpu.memory_space<any>>
    %c7_i32_69 = arith.constant 7 : i32
    %c0_i32_70 = arith.constant 0 : i32
    %85 = tpu.memref_slice %arg7[%c7_i32_69, %c0_i32_70] : memref<8x128xf32, #tpu.memory_space<vmem>> -> memref<1x128xf32, #tpu.memory_space<vmem>>
    %86 = tpu.memref_slice %arg8[%c7_i32_67] : memref<8x!tpu.dma_semaphore, #tpu.memory_space<semaphore_mem>> -> memref<1x!tpu.dma_semaphore, #tpu.memory_space<semaphore_mem>>
    %87 = tpu.memref_squeeze %86 : memref<1x!tpu.dma_semaphore, #tpu.memory_space<semaphore_mem>> -> memref<!tpu.dma_semaphore, #tpu.memory_space<semaphore_mem>>
    tpu.wait_dma2 semaphore(%87 : memref<!tpu.dma_semaphore, #tpu.memory_space<semaphore_mem>>) src(%84 : memref<1x128xf32, #tpu.memory_space<any>>) dst(%85 : memref<1x128xf32, #tpu.memory_space<vmem>>)
    %c0_71 = arith.constant 0 : index
    %c0_72 = arith.constant 0 : index
    %88 = vector.load %arg7[%c0_71, %c0_72] : memref<8x128xf32, #tpu.memory_space<vmem>>, vector<8x128xf32>
    %89 = arith.truncf %88 : vector<8x128xf32> to vector<8x128xbf16>
    %c0_73 = arith.constant 0 : index
    %c0_74 = arith.constant 0 : index
    %90 = vector.load %arg2[%c0_73, %c0_74] : memref<128x128xbf16, #tpu.memory_space<vmem>>, vector<128x128xbf16>
    %cst = arith.constant dense<0.000000e+00> : vector<8x128xf32>
    %91 = tpu.matmul %89, %90, %cst {dimension_numbers = #tpu.dot_dimension_numbers<[1], [0], [0], [1], [0, 0, 1, 1], [], []>} : vector<8x128xbf16>, vector<128x128xbf16>, vector<8x128xf32> -> vector<8x128xf32>
    %c0_75 = arith.constant 0 : index
    %c0_76 = arith.constant 0 : index
    %92 = vector.load %arg3[%c0_75, %c0_76] : memref<1x128xf32, #tpu.memory_space<vmem>>, vector<1x128xf32>
    %93 = vector.broadcast %92 : vector<1x128xf32> to vector<8x128xf32>
    %94 = arith.addf %91, %93 : vector<8x128xf32>
    %cst_77 = arith.constant 0.000000e+00 : f32
    %95 = vector.broadcast %cst_77 : f32 to vector<8x128xf32>
    %96 = arith.subf %95, %94 : vector<8x128xf32>
    %97 = math.exp %96 : vector<8x128xf32>
    %cst_78 = arith.constant 1.000000e+00 : f32
    %98 = vector.broadcast %cst_78 : f32 to vector<8x128xf32>
    %99 = arith.addf %98, %97 : vector<8x128xf32>
    %100 = tpu.reciprocal %99 {approx = true} : vector<8x128xf32> -> vector<8x128xf32>
    %101 = arith.mulf %94, %100 : vector<8x128xf32>
    %102 = arith.truncf %101 : vector<8x128xf32> to vector<8x128xbf16>
    %c0_79 = arith.constant 0 : index
    %c0_80 = arith.constant 0 : index
    %103 = vector.load %arg4[%c0_79, %c0_80] : memref<128x128xbf16, #tpu.memory_space<vmem>>, vector<128x128xbf16>
    %cst_81 = arith.constant dense<0.000000e+00> : vector<8x128xf32>
    %104 = tpu.matmul %102, %103, %cst_81 {dimension_numbers = #tpu.dot_dimension_numbers<[1], [0], [0], [1], [0, 0, 1, 1], [], []>} : vector<8x128xbf16>, vector<128x128xbf16>, vector<8x128xf32> -> vector<8x128xf32>
    %c0_82 = arith.constant 0 : index
    %c0_83 = arith.constant 0 : index
    %105 = vector.load %arg5[%c0_82, %c0_83] : memref<1x128xf32, #tpu.memory_space<vmem>>, vector<1x128xf32>
    %106 = vector.broadcast %105 : vector<1x128xf32> to vector<8x128xf32>
    %107 = arith.addf %104, %106 : vector<8x128xf32>
    %c0_84 = arith.constant 0 : index
    %c0_85 = arith.constant 0 : index
    %108 = vector.load %arg6[%c0_84, %c0_85] : memref<8x128xf32, #tpu.memory_space<vmem>>, vector<8x128xf32>
    tpu.vector_store %arg6[%c0_84, %c0_85], %107 {strides = array<i32>} : memref<8x128xf32, #tpu.memory_space<vmem>>, vector<8x128xf32>,
    return
  }
}

</mosaic_0001>

<llo_original>
// kernel: tpu_custom_call.1
$region0: #{tpu_custom_call.1}
  #allocation0 [shape = 'u32[]', space=smem, size = 0x4, offset = 0x4, fixed_abs, tag = 'smem constant byte address 0x4 - core index']
  #allocation1 [shape = 'u32[144,128]{1,0:T(1,128)}', space=vmem, size = 0x12000, scoped, tag = 'internal scratch']
  #allocation2 [shape = 'f32[8,128]{1,0:T(8,128)}', space=vmem, size = 0x1000, scoped, tag = 'scratch operand']
  #allocation3 [shape = 's32[8]{0}', space=sflag, size = 0x20, scoped, tag = 'scratch operand']
  #allocation12 [shape = 's32[]', space=sflag, size = 0x4, offset = 0, fixed_abs, tag = 'sflag constant byte address 0x0 - dummy sync flag']
  #allocation13 [shape = 's32[]', space=sflag, size = 0x4, offset = 0, fixed_abs, tag = 'sflag constant byte address 0x0 - dummy sync flag']
  #allocation14 [shape = 'u32[]', space=smem, size = 0x4, offset = 0x44, fixed_abs, tag = 'smem constant byte address 0x44 - assertion arg 0']
  #allocation15 [shape = 'u32[]', space=smem, size = 0x4, offset = 0x48, fixed_abs, tag = 'smem constant byte address 0x48 - assertion arg 1']
  #allocation16 [shape = 's32[]', space=sflag, size = 0x4, offset = 0, fixed_abs, tag = 'sflag constant byte address 0x0 - dummy sync flag']
  #allocation17 [shape = 's32[]', space=sflag, size = 0x4, offset = 0, fixed_abs, tag = 'sflag constant byte address 0x0 - dummy sync flag']
  #allocation18 [shape = 's32[]', space=sflag, size = 0x4, offset = 0, fixed_abs, tag = 'sflag constant byte address 0x0 - dummy sync flag']
  #allocation19 [shape = 's32[]', space=sflag, size = 0x4, offset = 0, fixed_abs, tag = 'sflag constant byte address 0x0 - dummy sync flag']
  #allocation20 [shape = 's32[]', space=sflag, size = 0x4, offset = 0, fixed_abs, tag = 'sflag constant byte address 0x0 - dummy sync flag']
  #allocation21 [shape = 's32[]', space=sflag, size = 0x4, offset = 0, fixed_abs, tag = 'sflag constant byte address 0x0 - dummy sync flag']
  #allocation22 [shape = 's32[]', space=sflag, size = 0x4, offset = 0, fixed_abs, tag = 'sflag constant byte address 0x0 - dummy sync flag']
  #allocation23 [shape = 's32[]', space=sflag, size = 0x4, offset = 0, fixed_abs, tag = 'sflag constant byte address 0x0 - dummy sync flag']
  #allocation24 [shape = 's32[]', space=sflag, size = 0x4, offset = 0, fixed_abs, tag = 'sflag constant byte address 0x0 - dummy sync flag']
  #allocation25 [shape = 's32[]', space=sflag, size = 0x4, offset = 0, fixed_abs, tag = 'sflag constant byte address 0x0 - dummy sync flag']
  #allocation26 [shape = 's32[]', space=sflag, size = 0x4, offset = 0, fixed_abs, tag = 'sflag constant byte address 0x0 - dummy sync flag']
  #allocation27 [shape = 's32[]', space=sflag, size = 0x4, offset = 0, fixed_abs, tag = 'sflag constant byte address 0x0 - dummy sync flag']
  #allocation28 [shape = 's32[]', space=sflag, size = 0x4, offset = 0, fixed_abs, tag = 'sflag constant byte address 0x0 - dummy sync flag']
  #allocation29 [shape = 's32[]', space=sflag, size = 0x4, offset = 0, fixed_abs, tag = 'sflag constant byte address 0x0 - dummy sync flag']
  %s0 = inlined_call_operand.hbm [shape: s32[8], index: 0, kind: input, shape index: {}]
  %s1 = inlined_call_operand.hbm [shape: f32[1024,128], index: 1, kind: input, shape index: {}]
  %s2 = inlined_call_operand.hbm [shape: bf16[128,128], index: 2, kind: input, shape index: {}]
  %s3 = inlined_call_operand.vmem [shape: f32[1,128], index: 3, kind: input, shape index: {}]
  %s4 = inlined_call_operand.hbm [shape: bf16[128,128], index: 4, kind: input, shape index: {}]
  %s5 = inlined_call_operand.vmem [shape: f32[1,128], index: 5, kind: input, shape index: {}]
  %s6 = inlined_call_operand.hbm [shape: f32[8,128], index: 6, kind: output, shape index: {}]
  %s7 = sld [smem:[#allocation0]]
  $region74: #{tpu_custom_call.1} parent=0
    _
  %s9 = ssub.s32 1, %s7
  %s10 = scalar_select 0, %s9, %s7
  $region1: #{tpu_custom_call.1} parent=0
    #allocation4 [shape = 'u8[512]{0}', space=smem, size = 0x200, scoped, tag = 'input window, operand 0, single buffered']
    #allocation5 [shape = 's32[1]{0}', space=sflag, size = 0x4, scoped, tag = 'scoped memory for tpu_custom_call.1']
    #allocation6 [shape = 's32[1]{0}', space=sflag, size = 0x4, scoped, tag = 'scoped memory for tpu_custom_call.1']
    #allocation7 [shape = 's32[1]{0}', space=sflag, size = 0x4, scoped, tag = 'scoped memory for tpu_custom_call.1']
    #allocation8 [shape = 'u8[32768]{0}', space=vmem, size = 0x8000, scoped, tag = 'input window, operand 2, single buffered']
    #allocation9 [shape = 'u8[32768]{0}', space=vmem, size = 0x8000, scoped, tag = 'input window, operand 4, single buffered']
    #allocation10 [shape = 's32[1]{0}', space=sflag, size = 0x4, scoped, tag = 'scoped memory for tpu_custom_call.1']
    #allocation11 [shape = 'u8[4096]{0}', space=vmem, size = 0x1000, scoped, tag = 'output window, operand 0, single buffered']
    %11 = vsyncpa [#allocation7], 0
    %12 = vsyncpa [#allocation5], 0
    %13 = vsyncpa [#allocation10], 0
    %14 = vsyncpa [#allocation6], 0
    // Predicated region
    $region2: #{tpu_custom_call.1} parent=1 // pred_check
      _
    $region3: #{tpu_custom_call.1} parent=1 // pred_check_branch
      %16 = sbr.rel (0) target = $region5
    $region4: #{tpu_custom_call.1} parent=1 // pred_region
      %s18 = ssub.s32 16, 16
      %19 = vsyncadd [#allocation7], %s18
      %22 = dma.hbm_to_smem %s0, 16, [#allocation4], [#allocation7]
    $region5: #{tpu_custom_call.1} parent=1 // pred_fallthru
      _
    // Predicated region
    $region6: #{tpu_custom_call.1} parent=1 // pred_check
      _
    $region7: #{tpu_custom_call.1} parent=1 // pred_check_branch
      %24 = sbr.rel (0) target = $region9
    $region8: #{tpu_custom_call.1} parent=1 // pred_region
      %s26 = ssub.s32 1024, 1024
      %27 = vsyncadd [#allocation5], %s26
      %s28 = sshll.u32 [#allocation8], 4
      %s29 = int_to_ptr.vmem [resolvable:$true] %s28
      %34 = dma.hbm_to_vmem [thread:$0]  %s2, 1024, %s29, [#allocation5], 64, 64, 4
    $region9: #{tpu_custom_call.1} parent=1 // pred_fallthru
      _
    // Predicated region
    $region10: #{tpu_custom_call.1} parent=1 // pred_check
      _
    $region11: #{tpu_custom_call.1} parent=1 // pred_check_branch
      %36 = sbr.rel (0) target = $region13
    $region12: #{tpu_custom_call.1} parent=1 // pred_region
      _
    $region13: #{tpu_custom_call.1} parent=1 // pred_fallthru
      _
    // Predicated region
    $region14: #{tpu_custom_call.1} parent=1 // pred_check
      _
    $region15: #{tpu_custom_call.1} parent=1 // pred_check_branch
      %38 = sbr.rel (0) target = $region17
    $region16: #{tpu_custom_call.1} parent=1 // pred_region
      %s40 = ssub.s32 1024, 1024
      %41 = vsyncadd [#allocation10], %s40
      %s42 = sshll.u32 [#allocation9], 4
      %s43 = int_to_ptr.vmem [resolvable:$true] %s42
      %48 = dma.hbm_to_vmem [thread:$0]  %s4, 1024, %s43, [#allocation10], 64, 64, 4
    $region17: #{tpu_custom_call.1} parent=1 // pred_fallthru
      _
    // Predicated region
    $region18: #{tpu_custom_call.1} parent=1 // pred_check
      _
    $region19: #{tpu_custom_call.1} parent=1 // pred_check_branch
      %50 = sbr.rel (0) target = $region21
    $region20: #{tpu_custom_call.1} parent=1 // pred_region
      _
    $region21: #{tpu_custom_call.1} parent=1 // pred_fallthru
      _
    // Predicated region
    $region22: #{tpu_custom_call.1} parent=1 // pred_check
      _
    $region23: #{tpu_custom_call.1} parent=1 // pred_check_branch
      %52 = sbr.rel (0) target = $region25
    $region24: #{tpu_custom_call.1} parent=1 // pred_region
      %53 = dma.done [#allocation7], 16
    $region25: #{tpu_custom_call.1} parent=1 // pred_fallthru
      _
    // Predicated region
    $region26: #{tpu_custom_call.1} parent=1 // pred_check
      _
    $region27: #{tpu_custom_call.1} parent=1 // pred_check_branch
      %55 = sbr.rel (0) target = $region29
    $region28: #{tpu_custom_call.1} parent=1 // pred_region
      %56 = dma.done [#allocation5], 1024
    $region29: #{tpu_custom_call.1} parent=1 // pred_fallthru
      _
    // Predicated region
    $region30: #{tpu_custom_call.1} parent=1 // pred_check
      _
    $region31: #{tpu_custom_call.1} parent=1 // pred_check_branch
      %58 = sbr.rel (0) target = $region33
    $region32: #{tpu_custom_call.1} parent=1 // pred_region
      %59 = dma.done [#allocation10], 1024
    $region33: #{tpu_custom_call.1} parent=1 // pred_fallthru
      _
    %60 = sfence
    %s62 = sld [smem:[#allocation4]]
    %p63 = scmp.gt.s32.totalorder %s62, 0
    %s64 = scalar_select %p63, %s62, 0
    %p65 = scmp.lt.s32.totalorder %s64, 999
    %s66 = scalar_select %p65, %s64, 999
    %s67 = smul.addr %s66, 16
    %s68 = scalar_lea.hbm %s1, %s67
    // Predicated region
    $region34: #{tpu_custom_call.1} parent=1 // pred_check
      _
    $region35: #{tpu_custom_call.1} parent=1 // pred_check_branch
      %70 = sbr.rel target = $region37
    $region36: #{tpu_custom_call.1} parent=1 // pred_region
      %71 = sst [smem:[#allocation14]] [#allocation13]
      %72 = sst [smem:[#allocation15]] [#allocation12]
    $region37: #{tpu_custom_call.1} parent=1 // pred_fallthru
      _
    %74 = shalt.err (0)
    %s76 = sshll.u32 [#allocation2], 4
    %s77 = int_to_ptr.vmem [resolvable:$true] %s76
    %79 = dma.hbm_to_vmem [thread:$0]  %s68, 16, %s77, [#allocation3]
    %s80 = sld [smem:[#allocation4 + $0x1]]
    %p81 = scmp.gt.s32.totalorder %s80, 0
    %s82 = scalar_select %p81, %s80, 0
    %p83 = scmp.lt.s32.totalorder %s82, 999
    %s84 = scalar_select %p83, %s82, 999
    %s85 = smul.addr %s84, 16
    %s86 = scalar_lea.hbm %s1, %s85
    %s87 = scalar_lea.vmem [#allocation2], 1
    %s88 = scalar_lea.sflag [#allocation3], 1
    // Predicated region
    $region38: #{tpu_custom_call.1} parent=1 // pred_check
      _
    $region39: #{tpu_custom_call.1} parent=1 // pred_check_branch
      %90 = sbr.rel target = $region41
    $region40: #{tpu_custom_call.1} parent=1 // pred_region
      %91 = sst [smem:[#allocation14]] [#allocation17]
      %92 = sst [smem:[#allocation15]] [#allocation16]
    $region41: #{tpu_custom_call.1} parent=1 // pred_fallthru
      _
    %94 = shalt.err (0)
    %s96 = sshll.u32 %s87, 4
    %s97 = int_to_ptr.vmem [resolvable:$true] %s96
    %99 = dma.hbm_to_vmem [thread:$0]  %s86, 16, %s97, %s88
    %s100 = sld [smem:[#allocation4 + $0x2]]
    %p101 = scmp.gt.s32.totalorder %s100, 0
    %s102 = scalar_select %p101, %s100, 0
    %p103 = scmp.lt.s32.totalorder %s102, 999
    %s104 = scalar_select %p103, %s102, 999
    %s105 = smul.addr %s104, 16
    %s106 = scalar_lea.hbm %s1, %s105
    %s107 = scalar_lea.vmem [#allocation2], 2
    %s108 = scalar_lea.sflag [#allocation3], 2
    // Predicated region
    $region42: #{tpu_custom_call.1} parent=1 // pred_check
      _
    $region43: #{tpu_custom_call.1} parent=1 // pred_check_branch
      %110 = sbr.rel target = $region45
    $region44: #{tpu_custom_call.1} parent=1 // pred_region
      %111 = sst [smem:[#allocation14]] [#allocation19]
      %112 = sst [smem:[#allocation15]] [#allocation18]
    $region45: #{tpu_custom_call.1} parent=1 // pred_fallthru
      _
    %114 = shalt.err (0)
    %s116 = sshll.u32 %s107, 4
    %s117 = int_to_ptr.vmem [resolvable:$true] %s116
    %119 = dma.hbm_to_vmem [thread:$0]  %s106, 16, %s117, %s108
    %s120 = sld [smem:[#allocation4 + $0x3]]
    %p121 = scmp.gt.s32.totalorder %s120, 0
    %s122 = scalar_select %p121, %s120, 0
    %p123 = scmp.lt.s32.totalorder %s122, 999
    %s124 = scalar_select %p123, %s122, 999
    %s125 = smul.addr %s124, 16
    %s126 = scalar_lea.hbm %s1, %s125
    %s127 = scalar_lea.vmem [#allocation2], 3
    %s128 = scalar_lea.sflag [#allocation3], 3
    // Predicated region
    $region46: #{tpu_custom_call.1} parent=1 // pred_check
      _
    $region47: #{tpu_custom_call.1} parent=1 // pred_check_branch
      %130 = sbr.rel target = $region49
    $region48: #{tpu_custom_call.1} parent=1 // pred_region
      %131 = sst [smem:[#allocation14]] [#allocation21]
      %132 = sst [smem:[#allocation15]] [#allocation20]
    $region49: #{tpu_custom_call.1} parent=1 // pred_fallthru
      _
    %134 = shalt.err (0)
    %s136 = sshll.u32 %s127, 4
    %s137 = int_to_ptr.vmem [resolvable:$true] %s136
    %139 = dma.hbm_to_vmem [thread:$0]  %s126, 16, %s137, %s128
    %s140 = sld [smem:[#allocation4 + $0x4]]
    %p141 = scmp.gt.s32.totalorder %s140, 0
    %s142 = scalar_select %p141, %s140, 0
    %p143 = scmp.lt.s32.totalorder %s142, 999
    %s144 = scalar_select %p143, %s142, 999
    %s145 = smul.addr %s144, 16
    %s146 = scalar_lea.hbm %s1, %s145
    %s147 = scalar_lea.vmem [#allocation2], 4
    %s148 = scalar_lea.sflag [#allocation3], 4
    // Predicated region
    $region50: #{tpu_custom_call.1} parent=1 // pred_check
      _
    $region51: #{tpu_custom_call.1} parent=1 // pred_check_branch
      %150 = sbr.rel target = $region53
    $region52: #{tpu_custom_call.1} parent=1 // pred_region
      %151 = sst [smem:[#allocation14]] [#allocation23]
      %152 = sst [smem:[#allocation15]] [#allocation22]
    $region53: #{tpu_custom_call.1} parent=1 // pred_fallthru
      _
    %154 = shalt.err (0)
    %s156 = sshll.u32 %s147, 4
    %s157 = int_to_ptr.vmem [resolvable:$true] %s156
    %159 = dma.hbm_to_vmem [thread:$0]  %s146, 16, %s157, %s148
    %s160 = sld [smem:[#allocation4 + $0x5]]
    %p161 = scmp.gt.s32.totalorder %s160, 0
    %s162 = scalar_select %p161, %s160, 0
    %p163 = scmp.lt.s32.totalorder %s162, 999
    %s164 = scalar_select %p163, %s162, 999
    %s165 = smul.addr %s164, 16
    %s166 = scalar_lea.hbm %s1, %s165
    %s167 = scalar_lea.vmem [#allocation2], 5
    %s168 = scalar_lea.sflag [#allocation3], 5
    // Predicated region
    $region54: #{tpu_custom_call.1} parent=1 // pred_check
      _
    $region55: #{tpu_custom_call.1} parent=1 // pred_check_branch
      %170 = sbr.rel target = $region57
    $region56: #{tpu_custom_call.1} parent=1 // pred_region
      %171 = sst [smem:[#allocation14]] [#allocation25]
      %172 = sst [smem:[#allocation15]] [#allocation24]
    $region57: #{tpu_custom_call.1} parent=1 // pred_fallthru
      _
    %174 = shalt.err (0)
    %s176 = sshll.u32 %s167, 4
    %s177 = int_to_ptr.vmem [resolvable:$true] %s176
    %179 = dma.hbm_to_vmem [thread:$0]  %s166, 16, %s177, %s168
    %s180 = sld [smem:[#allocation4 + $0x6]]
    %p181 = scmp.gt.s32.totalorder %s180, 0
    %s182 = scalar_select %p181, %s180, 0
    %p183 = scmp.lt.s32.totalorder %s182, 999
    %s184 = scalar_select %p183, %s182, 999
    %s185 = smul.addr %s184, 16
    %s186 = scalar_lea.hbm %s1, %s185
    %s187 = scalar_lea.vmem [#allocation2], 6
    %s188 = scalar_lea.sflag [#allocation3], 6
    // Predicated region
    $region58: #{tpu_custom_call.1} parent=1 // pred_check
      _
    $region59: #{tpu_custom_call.1} parent=1 // pred_check_branch
      %190 = sbr.rel target = $region61
    $region60: #{tpu_custom_call.1} parent=1 // pred_region
      %191 = sst [smem:[#allocation14]] [#allocation27]
      %192 = sst [smem:[#allocation15]] [#allocation26]
    $region61: #{tpu_custom_call.1} parent=1 // pred_fallthru
      _
    %194 = shalt.err (0)
    %s196 = sshll.u32 %s187, 4
    %s197 = int_to_ptr.vmem [resolvable:$true] %s196
    %199 = dma.hbm_to_vmem [thread:$0]  %s186, 16, %s197, %s188
    %s200 = sld [smem:[#allocation4 + $0x7]]
    %p201 = scmp.gt.s32.totalorder %s200, 0
    %s202 = scalar_select %p201, %s200, 0
    %p203 = scmp.lt.s32.totalorder %s202, 999
    %s204 = scalar_select %p203, %s202, 999
    %s205 = smul.addr %s204, 16
    %s206 = scalar_lea.hbm %s1, %s205
    %s207 = scalar_lea.vmem [#allocation2], 7
    %s208 = scalar_lea.sflag [#allocation3], 7
    // Predicated region
    $region62: #{tpu_custom_call.1} parent=1 // pred_check
      _
    $region63: #{tpu_custom_call.1} parent=1 // pred_check_branch
      %210 = sbr.rel target = $region65
    $region64: #{tpu_custom_call.1} parent=1 // pred_region
      %211 = sst [smem:[#allocation14]] [#allocation29]
      %212 = sst [smem:[#allocation15]] [#allocation28]
    $region65: #{tpu_custom_call.1} parent=1 // pred_fallthru
      _
    %214 = shalt.err (0)
    %s216 = sshll.u32 %s207, 4
    %s217 = int_to_ptr.vmem [resolvable:$true] %s216
    %219 = dma.hbm_to_vmem [thread:$0]  %s206, 16, %s217, %s208
    %s220 = smul.u32 1, 1
    %s221 = sshll.u32 %s220, 4
    %222 = dma.done [#allocation3], %s221
    %s223 = sshll.u32 %s220, 4
    %224 = dma.done %s88, %s223
    %s225 = sshll.u32 %s220, 4
    %226 = dma.done %s108, %s225
    %s227 = sshll.u32 %s220, 4
    %228 = dma.done %s128, %s227
    %s229 = sshll.u32 %s220, 4
    %230 = dma.done %s148, %s229
    %s231 = sshll.u32 %s220, 4
    %232 = dma.done %s168, %s231
    %s233 = sshll.u32 %s220, 4
    %234 = dma.done %s188, %s233
    %s235 = sshll.u32 %s220, 4
    %236 = dma.done %s208, %s235
    %v237 = vld [vmem:[#allocation2] sm:$0xff]
    %v238 = vpack.c.bf16 %v237, %v237
    %v239 = vld [vmem:[#allocation8] sm:$0xf]
    %v240 = vld [vmem:[#allocation8 + $0x4] sm:$0xf]
    %v241 = vld [vmem:[#allocation8 + $0x8] sm:$0xf]
    %v242 = vld [vmem:[#allocation8 + $0xc] sm:$0xf]
    %v243 = vld [vmem:[#allocation8 + $0x10] sm:$0xf]
    %v244 = vld [vmem:[#allocation8 + $0x14] sm:$0xf]
    %v245 = vld [vmem:[#allocation8 + $0x18] sm:$0xf]
    %v246 = vld [vmem:[#allocation8 + $0x1c] sm:$0xf]
    %v247 = vld [vmem:[#allocation8 + $0x20] sm:$0xf]
    %v248 = vld [vmem:[#allocation8 + $0x24] sm:$0xf]
    %v249 = vld [vmem:[#allocation8 + $0x28] sm:$0xf]
    %v250 = vld [vmem:[#allocation8 + $0x2c] sm:$0xf]
    %v251 = vld [vmem:[#allocation8 + $0x30] sm:$0xf]
    %v252 = vld [vmem:[#allocation8 + $0x34] sm:$0xf]
    %v253 = vld [vmem:[#allocation8 + $0x38] sm:$0xf]
    %v254 = vld [vmem:[#allocation8 + $0x3c] sm:$0xf]
    %v255 = vld [vmem:[%s3] sm:$0x1]
    %v257 = vlaneseq
    %v258 = vshrl.u32 %v257, 7
    %v259 = vsub.s32 0, %v258
    %v260 = vrot.slane %v255, %v259
    %v278 = vunpack.c.l.b16 %v239
    %v279 = vunpack.c.l.b16 %v240
    %v280 = vunpack.c.l.b16 %v241
    %v281 = vunpack.c.l.b16 %v242
    %v282 = vunpack.c.l.b16 %v243
    %v283 = vunpack.c.l.b16 %v244
    %v284 = vunpack.c.l.b16 %v245
    %v285 = vunpack.c.l.b16 %v246
    %v286 = vunpack.c.l.b16 %v247
    %v287 = vunpack.c.l.b16 %v248
    %v288 = vunpack.c.l.b16 %v249
    %v289 = vunpack.c.l.b16 %v250
    %v290 = vunpack.c.l.b16 %v251
    %v291 = vunpack.c.l.b16 %v252
    %v292 = vunpack.c.l.b16 %v253
    %v293 = vunpack.c.l.b16 %v254
    %v294 = vpack.c.b16 %v279, %v278
    %v295 = vpack.c.b16 %v281, %v280
    %v296 = vpack.c.b16 %v283, %v282
    %v297 = vpack.c.b16 %v285, %v284
    %v298 = vpack.c.b16 %v287, %v286
    %v299 = vpack.c.b16 %v289, %v288
    %v300 = vpack.c.b16 %v291, %v290
    %v301 = vpack.c.b16 %v293, %v292
    %310 = vmatprep.subr.bf16.mxu0 0
    %311 = vmatpush1.bf16.msra.mxu0 %v301
    %312 = vmatprep.subr.bf16.mxu0 0
    %313 = vmatpush1.bf16.msra.mxu0 %v300
    %314 = vmatprep.subr.bf16.mxu0 0
    %315 = vmatpush1.bf16.msra.mxu0 %v299
    %316 = vmatprep.subr.bf16.mxu0 0
    %317 = vmatpush1.bf16.msra.mxu0 %v298
    %318 = vmatprep.subr.bf16.mxu0 0
    %319 = vmatpush1.bf16.msra.mxu0 %v297
    %320 = vmatprep.subr.bf16.mxu0 0
    %321 = vmatpush1.bf16.msra.mxu0 %v296
    %322 = vmatprep.subr.bf16.mxu0 0
    %323 = vmatpush1.bf16.msra.mxu0 %v295
    %324 = vmatprep.subr.bf16.mxu0 0
    %325 = vmatpush1.bf16.msra.mxu0 %v294
    %326 = vmatprep.subr.bf16.mxu0 0
    %327 = vmatpush2.bf16.msra.mxu0 0
    %328 = vmatprep.subr.bf16.mxu0 0
    %329 = vmatpush2.bf16.msra.mxu0 0
    %330 = vmatprep.subr.bf16.mxu0 0
    %331 = vmatpush2.bf16.msra.mxu0 0
    %332 = vmatprep.subr.bf16.mxu0 0
    %333 = vmatpush2.bf16.msra.mxu0 0
    %334 = vmatprep.subr.bf16.mxu0 0
    %335 = vmatpush2.bf16.msra.mxu0 0
    %336 = vmatprep.subr.bf16.mxu0 0
    %337 = vmatpush2.bf16.msra.mxu0 0
    %338 = vmatprep.subr.bf16.mxu0 0
    %339 = vmatpush2.bf16.msra.mxu0 0
    %340 = vmatprep.subr.bf16.mxu0 0
    %341 = vmatpush2.bf16.msra.mxu0 0
    %342 = vmatprep.mubr.bf16.mxu0 0
    %343 = vmatmul.mubr.bf16.gmra.mxu0 %v238
    %v344 = vpop.f32.mrf.mxu0
    %v345 = vadd.f32 %v260, %v344
    %v346 = vpop.f32.mrf.mxu0
    %v347 = vpop.f32.mrf.mxu0
    %v348 = vpop.f32.mrf.mxu0
    %349 = vdwg.mxu0
    %v350 = vsub.f32 0.0, %v345
    %v351 = vmul.f32 %v350, 1.442695
    %v352 = vpow.pop %v351
    %v353 = vadd.f32 %v352, 1.0
    %v354 = vrcp.pop %v353
    %v355 = vmul.f32 %v345, %v354
    %v356 = vpack.c.bf16 %v355, %v355
    %v357 = vld [vmem:[#allocation9] sm:$0xf]
    %v358 = vld [vmem:[#allocation9 + $0x4] sm:$0xf]
    %v359 = vld [vmem:[#allocation9 + $0x8] sm:$0xf]
    %v360 = vld [vmem:[#allocation9 + $0xc] sm:$0xf]
    %v361 = vld [vmem:[#allocation9 + $0x10] sm:$0xf]
    %v362 = vld [vmem:[#allocation9 + $0x14] sm:$0xf]
    %v363 = vld [vmem:[#allocation9 + $0x18] sm:$0xf]
    %v364 = vld [vmem:[#allocation9 + $0x1c] sm:$0xf]
    %v365 = vld [vmem:[#allocation9 + $0x20] sm:$0xf]
    %v366 = vld [vmem:[#allocation9 + $0x24] sm:$0xf]
    %v367 = vld [vmem:[#allocation9 + $0x28] sm:$0xf]
    %v368 = vld [vmem:[#allocation9 + $0x2c] sm:$0xf]
    %v369 = vld [vmem:[#allocation9 + $0x30] sm:$0xf]
    %v370 = vld [vmem:[#allocation9 + $0x34] sm:$0xf]
    %v371 = vld [vmem:[#allocation9 + $0x38] sm:$0xf]
    %v372 = vld [vmem:[#allocation9 + $0x3c] sm:$0xf]
    %v373 = vld [vmem:[%s5] sm:$0x1]
    %v375 = vlaneseq
    %v376 = vshrl.u32 %v375, 7
    %v377 = vsub.s32 0, %v376
    %v378 = vrot.slane %v373, %v377
    %v396 = vunpack.c.l.b16 %v357
    %v397 = vunpack.c.l.b16 %v358
    %v398 = vunpack.c.l.b16 %v359
    %v399 = vunpack.c.l.b16 %v360
    %v400 = vunpack.c.l.b16 %v361
    %v401 = vunpack.c.l.b16 %v362
    %v402 = vunpack.c.l.b16 %v363
    %v403 = vunpack.c.l.b16 %v364
    %v404 = vunpack.c.l.b16 %v365
    %v405 = vunpack.c.l.b16 %v366
    %v406 = vunpack.c.l.b16 %v367
    %v407 = vunpack.c.l.b16 %v368
    %v408 = vunpack.c.l.b16 %v369
    %v409 = vunpack.c.l.b16 %v370
    %v410 = vunpack.c.l.b16 %v371
    %v411 = vunpack.c.l.b16 %v372
    %v412 = vpack.c.b16 %v397, %v396
    %v413 = vpack.c.b16 %v399, %v398
    %v414 = vpack.c.b16 %v401, %v400
    %v415 = vpack.c.b16 %v403, %v402
    %v416 = vpack.c.b16 %v405, %v404
    %v417 = vpack.c.b16 %v407, %v406
    %v418 = vpack.c.b16 %v409, %v408
    %v419 = vpack.c.b16 %v411, %v410
    %428 = vmatprep.subr.bf16.mxu0 0
    %429 = vmatpush1.bf16.msra.mxu0 %v419
    %430 = vmatprep.subr.bf16.mxu0 0
    %431 = vmatpush1.bf16.msra.mxu0 %v418
    %432 = vmatprep.subr.bf16.mxu0 0
    %433 = vmatpush1.bf16.msra.mxu0 %v417
    %434 = vmatprep.subr.bf16.mxu0 0
    %435 = vmatpush1.bf16.msra.mxu0 %v416
    %436 = vmatprep.subr.bf16.mxu0 0
    %437 = vmatpush1.bf16.msra.mxu0 %v415
    %438 = vmatprep.subr.bf16.mxu0 0
    %439 = vmatpush1.bf16.msra.mxu0 %v414
    %440 = vmatprep.subr.bf16.mxu0 0
    %441 = vmatpush1.bf16.msra.mxu0 %v413
    %442 = vmatprep.subr.bf16.mxu0 0
    %443 = vmatpush1.bf16.msra.mxu0 %v412
    %444 = vmatprep.subr.bf16.mxu0 0
    %445 = vmatpush2.bf16.msra.mxu0 0
    %446 = vmatprep.subr.bf16.mxu0 0
    %447 = vmatpush2.bf16.msra.mxu0 0
    %448 = vmatprep.subr.bf16.mxu0 0
    %449 = vmatpush2.bf16.msra.mxu0 0
    %450 = vmatprep.subr.bf16.mxu0 0
    %451 = vmatpush2.bf16.msra.mxu0 0
    %452 = vmatprep.subr.bf16.mxu0 0
    %453 = vmatpush2.bf16.msra.mxu0 0
    %454 = vmatprep.subr.bf16.mxu0 0
    %455 = vmatpush2.bf16.msra.mxu0 0
    %456 = vmatprep.subr.bf16.mxu0 0
    %457 = vmatpush2.bf16.msra.mxu0 0
    %458 = vmatprep.subr.bf16.mxu0 0
    %459 = vmatpush2.bf16.msra.mxu0 0
    %460 = vmatprep.mubr.bf16.mxu0 0
    %461 = vmatmul.mubr.bf16.gmra.mxu0 %v356
    %v462 = vpop.f32.mrf.mxu0
    %v463 = vadd.f32 %v378, %v462
    %v464 = vpop.f32.mrf.mxu0
    %v465 = vpop.f32.mrf.mxu0
    %v466 = vpop.f32.mrf.mxu0
    %467 = vdwg.mxu0
    %468 = vst [vmem:[#allocation11] sm:$0xff] %v463
    // Predicated region
    $region66: #{tpu_custom_call.1} parent=1 // pred_check
      _
    $region67: #{tpu_custom_call.1} parent=1 // pred_check_branch
      %470 = sbr.rel (0) target = $region69
    $region68: #{tpu_custom_call.1} parent=1 // pred_region
      %s472 = ssub.s32 128, 128
      %473 = vsyncadd [#allocation6], %s472
      %s475 = sshll.u32 [#allocation11], 4
      %s476 = int_to_ptr.vmem [resolvable:$true] %s475
      %478 = dma.vmem_to_hbm [thread:$0]  %s476, 128, %s6, [#allocation6]
    $region69: #{tpu_custom_call.1} parent=1 // pred_fallthru
      _
    // Predicated region
    $region70: #{tpu_custom_call.1} parent=1 // pred_check
      _
    $region71: #{tpu_custom_call.1} parent=1 // pred_check_branch
      %480 = sbr.rel (0) target = $region73
    $region72: #{tpu_custom_call.1} parent=1 // pred_region
      %481 = dma.done [#allocation6], 128
    $region73: #{tpu_custom_call.1} parent=1 // pred_fallthru
      _
    %482 = vsyncpa [#allocation5], 1
    %483 = vsyncpa [#allocation10], 1
    %484 = vsyncpa [#allocation6], 1
    %485 = vsyncpa [#allocation7], 1
  %486 = vsyncmov [#allocation3]
  %s487 = vpop.sfrf %486
  %p488 = scmp.eq.s32.totalorder %s487, 0
  %p489 = pneg %p488
  %491 = shalt.err (%p489)
  %s492 = scalar_lea.sflag [#allocation3], 1
  %493 = vsyncmov %s492
  %s494 = vpop.sfrf %493
  %p495 = scmp.eq.s32.totalorder %s494, 0
  %p496 = pneg %p495
  %498 = shalt.err (%p496)
  %s499 = scalar_lea.sflag [#allocation3], 2
  %500 = vsyncmov %s499
  %s501 = vpop.sfrf %500
  %p502 = scmp.eq.s32.totalorder %s501, 0
  %p503 = pneg %p502
  %505 = shalt.err (%p503)
  %s506 = scalar_lea.sflag [#allocation3], 3
  %507 = vsyncmov %s506
  %s508 = vpop.sfrf %507
  %p509 = scmp.eq.s32.totalorder %s508, 0
  %p510 = pneg %p509
  %512 = shalt.err (%p510)
  %s513 = scalar_lea.sflag [#allocation3], 4
  %514 = vsyncmov %s513
  %s515 = vpop.sfrf %514
  %p516 = scmp.eq.s32.totalorder %s515, 0
  %p517 = pneg %p516
  %519 = shalt.err (%p517)
  %s520 = scalar_lea.sflag [#allocation3], 5
  %521 = vsyncmov %s520
  %s522 = vpop.sfrf %521
  %p523 = scmp.eq.s32.totalorder %s522, 0
  %p524 = pneg %p523
  %526 = shalt.err (%p524)
  %s527 = scalar_lea.sflag [#allocation3], 6
  %528 = vsyncmov %s527
  %s529 = vpop.sfrf %528
  %p530 = scmp.eq.s32.totalorder %s529, 0
  %p531 = pneg %p530
  %533 = shalt.err (%p531)
  %s534 = scalar_lea.sflag [#allocation3], 7
  %535 = vsyncmov %s534
  %s536 = vpop.sfrf %535
  %p537 = scmp.eq.s32.totalorder %s536, 0
  %p538 = pneg %p537
  %540 = shalt.err (%p538)

</llo_original>
